<compile_context>
chip_gen: v6e
topology: v6e:2x2x1
jax: 0.10.0
libtpu: 0.0.40
codegen_flags: <defaults>
</compile_context>

<pallas_src>
import jax
import jax.numpy as jnp
from jax.experimental import pallas as pl
from jax.experimental.pallas import tpu as pltpu


# ---------------------------------------------------------------------------
# Pallas kernel: 1x1 conv (pointwise channel matmul) + bias
# ---------------------------------------------------------------------------
def _conv1x1_kernel(x_ref, w_ref, b_ref, o_ref):
    # x_ref : (1, Cin, T)   input tile, native dtype (lane axis = spatial)
    # w_ref : (Cout, Cin)   conv weight (grid-resident)
    # b_ref : (Cout, 1)     bias, f32 (grid-resident)
    # o_ref : (1, Cout, T)  output tile, same dtype as the input
    x = x_ref[0]                                   # (Cin, T)
    w = w_ref[...].astype(x.dtype)                 # (Cout, Cin)
    # Memory-bound layer: full f32 accuracy when inputs are f32 (bf16 buys
    # nothing here); bf16 inputs use the normal bf16 MXU path.
    prec = (jax.lax.Precision.HIGHEST if x.dtype == jnp.float32
            else jax.lax.Precision.DEFAULT)
    acc = jnp.dot(w, x, preferred_element_type=jnp.float32, precision=prec)
    o_ref[0] = (acc + b_ref[...]).astype(o_ref.dtype)


# ---------------------------------------------------------------------------
# Tile selection
# ---------------------------------------------------------------------------
def _pick_spatial_tile(hw, n, cin, cout, in_item, out_item,
                       vmem_budget_bytes=8 << 20, min_grid_steps=8,
                       min_tile=512):
    """Spatial tile: a multiple of 128 (or the full H*W when H*W <= 128) that
    (a) fits a conservative VMEM budget including the double-buffered in/out
        blocks and the in-kernel f32 accumulator, and
    (b) leaves the grid with >= min_grid_steps steps so both v7x TensorCores
        get work even for batch-1 inputs (tiles above ~512 lanes are already
        on the HBM-roofline plateau, so shrinking costs nothing)."""
    if hw <= 128:
        return hw                                   # block == full dim: legal
    per_elem = 2 * (cin * in_item + cout * out_item) + cout * 4  # + f32 acc
    t = min(hw, max(128, vmem_budget_bytes // per_elem))
    t = max(128, (t // 128) * 128)
    while t > min_tile and n * pl.cdiv(hw, t) < min_grid_steps:
        t = max(128, max(min_tile // 128, (t // 2) // 128) * 128)
    return t


# ---------------------------------------------------------------------------
# Wrapper
# ---------------------------------------------------------------------------
def out_conv(x_nchw, w, b):
    """OutConv forward.

    x_nchw : (N, Cin, H, W)  f32 or bf16
    w      : (Cout, Cin)     conv weight (PyTorch (Cout,Cin,1,1) squeezed)
    b      : (Cout,)         bias
    returns  (N, Cout, H, W) in x's dtype
    """
    N, Cin, H, W = x_nchw.shape
    Cout = w.shape[0]
    HW = H * W

    # Free reshape (row-major merge of trailing dims, no copy); keep the
    # caller's dtype on both the read and the write side.
    x = x_nchw.reshape(N, Cin, HW)
    w2 = w.reshape(Cout, Cin)
    b2 = b.reshape(Cout, 1).astype(jnp.float32)     # tiny; f32 bias epilogue

    out_dtype = x.dtype
    in_item = jnp.dtype(x.dtype).itemsize
    out_item = jnp.dtype(out_dtype).itemsize
    w_item = jnp.dtype(w2.dtype).itemsize

    tile_hw = _pick_spatial_tile(HW, N, Cin, Cout, in_item, out_item)
    grid = (N, pl.cdiv(HW, tile_hw))                # masked last block if ragged

    # Scoped-VMEM need (double-buffered x/out blocks + resident w/b + f32 acc
    # temp), with 2x headroom; keeps v5e's 16 MiB scoped default from tripping
    # while never exceeding v7x's 64 MiB physical VMEM.
    vmem_need = (2 * tile_hw * (Cin * in_item + Cout * out_item)
                 + tile_hw * Cout * 4
                 + 2 * Cout * Cin * w_item + 2 * Cout * 4)
    vmem_limit = int(min(64 << 20, max(2 * vmem_need, 16 << 20)))

    cost = pl.CostEstimate(
        flops=2 * N * HW * Cin * Cout,
        transcendentals=0,
        bytes_accessed=(N * HW * (Cin * in_item + Cout * out_item)
                        + Cout * Cin * w_item + Cout * 4))

    out = pl.pallas_call(
        _conv1x1_kernel,
        out_shape=jax.ShapeDtypeStruct((N, Cout, HW), out_dtype),
        grid_spec=pltpu.PrefetchScalarGridSpec(
            num_scalar_prefetch=0,
            grid=grid,
            in_specs=[
                pl.BlockSpec((1, Cin, tile_hw), lambda n, t: (n, 0, t)),
                pl.BlockSpec((Cout, Cin), lambda n, t: (0, 0)),
                pl.BlockSpec((Cout, 1), lambda n, t: (0, 0)),
            ],
            out_specs=pl.BlockSpec((1, Cout, tile_hw), lambda n, t: (n, 0, t)),
        ),
        compiler_params=pltpu.CompilerParams(
            dimension_semantics=("parallel", "parallel"),
            vmem_limit_bytes=vmem_limit),
        cost_estimate=cost,
    )(x, w2, b2)

    return out.reshape(N, Cout, H, W)


# ---------------------------------------------------------------------------
# Demo / self-check
# ---------------------------------------------------------------------------
if __name__ == "__main__":
    key = jax.random.PRNGKey(0)
    kx, kw, kb = jax.random.split(key, 3)

    # OutConv(in_channels=8, out_channels=4) on a small NCHW input.
    in_channels, out_channels = 8, 4
    B, H, W = 2, 16, 16

    x = jax.random.normal(kx, (B, in_channels, H, W), jnp.float32)
    w = 0.1 * jax.random.normal(kw, (out_channels, in_channels), jnp.float32)
    b = 0.05 * jax.random.normal(kb, (out_channels,), jnp.float32)

    out = out_conv(x, w, b)
    out = jax.block_until_ready(out)
    assert out.shape == (B, out_channels, H, W), out.shape
    assert out.dtype == x.dtype, out.dtype

    # Pure-JAX reference (f32, highest precision — kernel now matches in f32).
    ref = (jnp.einsum("oc,nchw->nohw", w, x,
                      precision=jax.lax.Precision.HIGHEST)
           + b[None, :, None, None])
    assert jnp.allclose(out, ref, rtol=1e-4, atol=1e-4), \
        float(jnp.max(jnp.abs(out - ref)))

    print("KERNEL_OK")
</pallas_src>

<mosaic_0001>
module attributes {stable_mosaic.version = 11 : i64} {
  func.func @_conv1x1_kernel(%arg0: i32, %arg1: i32, %arg2: memref<1x8x256xf32, #tpu.memory_space<vmem>>, %arg3: memref<4x8xf32, #tpu.memory_space<vmem>>, %arg4: memref<4x1xf32, #tpu.memory_space<vmem>>, %arg5: memref<1x4x256xf32, #tpu.memory_space<vmem>>) attributes {dimension_semantics = [#tpu.dimension_semantics<parallel>, #tpu.dimension_semantics<parallel>], iteration_bounds = array<i64: 2, 1>, scalar_prefetch = 0 : i64, scratch_operands = 0 : i64, tpu.core_type = #tpu.core_type<tc>, window_params = [{transform_indices = @transform_0, window_bounds = array<i64: 1, 8, 256>}, {pipeline_mode = #tpu.pipeline_mode<synchronous>, transform_indices = @transform_1, window_bounds = array<i64: 4, 8>}, {pipeline_mode = #tpu.pipeline_mode<synchronous>, transform_indices = @transform_2, window_bounds = array<i64: 4, 1>}, {transform_indices = @transform_3, window_bounds = array<i64: 1, 4, 256>}]} {
    %c0 = arith.constant 0 : index
    %c0_0 = arith.constant 0 : index
    %c0_1 = arith.constant 0 : index
    %0 = vector.load %arg2[%c0, %c0_0, %c0_1] : memref<1x8x256xf32, #tpu.memory_space<vmem>>, vector<1x8x256xf32>
    %1 = vector.shape_cast %0 : vector<1x8x256xf32> to vector<8x256xf32>
    %c0_2 = arith.constant 0 : index
    %c0_3 = arith.constant 0 : index
    %2 = vector.load %arg3[%c0_2, %c0_3] : memref<4x8xf32, #tpu.memory_space<vmem>>, vector<4x8xf32>
    %cst = arith.constant dense<0.000000e+00> : vector<4x256xf32>
    %3 = tpu.matmul %2, %1, %cst {dimension_numbers = #tpu.dot_dimension_numbers<[1], [0], [0], [1], [0, 0, 1, 1], [], []>, precision = #tpu.contract_precision<fp32>} : vector<4x8xf32>, vector<8x256xf32>, vector<4x256xf32> -> vector<4x256xf32>
    %c0_4 = arith.constant 0 : index
    %c0_5 = arith.constant 0 : index
    %4 = vector.load %arg4[%c0_4, %c0_5] : memref<4x1xf32, #tpu.memory_space<vmem>>, vector<4x1xf32>
    %5 = vector.broadcast %4 : vector<4x1xf32> to vector<4x256xf32>
    %6 = arith.addf %3, %5 : vector<4x256xf32>
    %c0_6 = arith.constant 0 : index
    %c0_7 = arith.constant 0 : index
    %c0_8 = arith.constant 0 : index
    %7 = vector.load %arg5[%c0_6, %c0_7, %c0_8] : memref<1x4x256xf32, #tpu.memory_space<vmem>>, vector<1x4x256xf32>
    %8 = vector.shape_cast %7 : vector<1x4x256xf32> to vector<4x256xf32>
    %9 = vector.shape_cast %6 : vector<4x256xf32> to vector<1x4x256xf32>
    tpu.vector_store %arg5[%c0_6, %c0_7, %c0_8], %9 {strides = array<i32>} : memref<1x4x256xf32, #tpu.memory_space<vmem>>, vector<1x4x256xf32>,
    return
  }
  func.func @transform_0(%arg0: i32, %arg1: i32) -> (i32, i32, i32) {
    %c0_i32 = arith.constant 0 : i32
    %c0_i32_0 = arith.constant 0 : i32
    return %arg0, %c0_i32, %arg1 : i32, i32, i32
  }
  func.func @transform_1(%arg0: i32, %arg1: i32) -> (i32, i32) {
    %c0_i32 = arith.constant 0 : i32
    %c0_i32_0 = arith.constant 0 : i32
    %c0_i32_1 = arith.constant 0 : i32
    return %c0_i32, %c0_i32_0 : i32, i32
  }
  func.func @transform_2(%arg0: i32, %arg1: i32) -> (i32, i32) {
    %c0_i32 = arith.constant 0 : i32
    %c0_i32_0 = arith.constant 0 : i32
    %c0_i32_1 = arith.constant 0 : i32
    return %c0_i32, %c0_i32_0 : i32, i32
  }
  func.func @transform_3(%arg0: i32, %arg1: i32) -> (i32, i32, i32) {
    %c0_i32 = arith.constant 0 : i32
    %c0_i32_0 = arith.constant 0 : i32
    return %arg0, %c0_i32, %arg1 : i32, i32, i32
  }
}

</mosaic_0001>

<llo_original>
// kernel: tpu_custom_call.1
$region0: #{tpu_custom_call.1}
  #allocation0 [shape = 'u32[]', space=smem, size = 0x4, offset = 0x4, fixed_abs, tag = 'smem constant byte address 0x4 - core index']
  #allocation1 [shape = 'u32[144,128]{1,0:T(1,128)}', space=vmem, size = 0x12000, scoped, tag = 'internal scratch']
  %s0 = inlined_call_operand.hbm [shape: f32[2,8,256], index: 0, kind: input, shape index: {}]
  %s1 = inlined_call_operand.vmem [shape: f32[4,8], index: 1, kind: input, shape index: {}]
  %s2 = inlined_call_operand.vmem [shape: f32[4,1], index: 2, kind: input, shape index: {}]
  %s3 = inlined_call_operand.hbm [shape: f32[2,4,256], index: 3, kind: output, shape index: {}]
  %s4 = sld [smem:[#allocation0]]
  $region49: #{tpu_custom_call.1} parent=0
    _
  %s6 = ssub.s32 1, %s4
  %s7 = scalar_select 0, %s6, %s4
  $region1: #{tpu_custom_call.1} parent=0
    #allocation2 [shape = 'u8[16384]{0}', space=vmem, size = 0x4000, scoped, tag = 'input window, operand 0']
    #allocation3 [shape = 's32[2]{0}', space=sflag, size = 0x8, scoped, tag = 'scoped memory for tpu_custom_call.1']
    #allocation4 [shape = 's32[2]{0}', space=sflag, size = 0x8, scoped, tag = 'scoped memory for tpu_custom_call.1']
    #allocation5 [shape = 'u8[8192]{0}', space=vmem, size = 0x2000, scoped, tag = 'output window, operand 0']
    %8 = vsyncpa [#allocation3], 0
    %s9 = scalar_lea.sflag [#allocation3], 1
    %10 = vsyncpa %s9, 0
    %11 = vsyncpa [#allocation4], 0
    %s12 = scalar_lea.sflag [#allocation4], 1
    %13 = vsyncpa %s12, 0
    loop: start=0, step=1, limit=4
    $region2: #{tpu_custom_call.1} parent=1 // loop_pre_header
      _
    $region3: #{tpu_custom_call.1} parent=1 // loop_header
      %s15 = sphi 0, %s19
      %p16 = scmp.ge.s32.totalorder %s15, 4
      %s22 = sphi 0, %s34
      %s23 = sphi 0, %s30
      %s24 = sphi 0, %s22
      %s25 = sphi 0, %s23
      %s26 = sphi 0, %s24
      %s27 = sphi 0, %s25
      %s39 = sphi 0, %s41
      %s42 = sphi 0, %s39
      %s43 = sphi 0, %s42
      %s59 = sphi 0, %s43
      %s63 = sphi 0, %s63
      %s65 = sphi 0, %s63
      %s66 = sphi 0, %s65
      %s80 = sphi 0, %s66
      %s84 = sphi 0, %s84
      %s86 = sphi 0, %s84
      %s87 = sphi 0, %s86
      %s101 = sphi 0, %s87
      %s109 = sphi 0, %s111
      %s112 = sphi 0, %s109
      %s113 = sphi 0, %s112
      %s129 = sphi 0, %s113
    $region4: #{tpu_custom_call.1} parent=1 // loop_header_branch
      %18 = sbr.rel (%p16) target = $region8
    $region5: #{tpu_custom_call.1} parent=1 // loop_body
      %s20 = ssub.s32 %s15, 1
      %s21 = ssub.s32 %s15, 2
      %s28 = sadd.s32 1, %s23
      %p29 = scmp.ge.s32.totalorder %s28, 1
      %s30 = scalar_select %p29, 0, %s28
      %s31 = sadd.s32 1, %s22
      %s32 = scalar_select %p29, %s31, %s22
      %p33 = scmp.ge.s32.totalorder %s32, 2
      %s34 = scalar_select %p33, 0, %s32
      %s35 = ssub.s32 %s22, %s34
      %s36 = ssub.s32 %s23, %s30
      %s37 = sor.u32 %s35, %s36
      %p38 = scmp.eq.s32.totalorder %s37, 0
      %s40 = sadd.s32 %s39, 1
      %s41 = scalar_select %p38, %s39, %s40
      %p44 = pneg %p38
      %p45 = scmp.eq.s32.totalorder %s15, 1
      %p46 = por %p44, %p45
      %p47 = scmp.ne.s32.totalorder %s39, %s42
      %p48 = scmp.eq.s32.totalorder %s15, 0
      %p49 = por %p47, %p48
      %p50 = scmp.ne.s32.totalorder %s39, %s42
      %p51 = scmp.eq.s32.totalorder %s20, 1
      %p52 = por %p50, %p51
      %p53 = scmp.ne.s32.totalorder %s42, %s43
      %p54 = scmp.eq.s32.totalorder %s20, 0
      %p55 = por %p53, %p54
      %p56 = scmp.ne.s32.totalorder %s42, %s43
      %p57 = scmp.eq.s32.totalorder %s21, 1
      %p58 = por %p56, %p57
      %p60 = scmp.ne.s32.totalorder %s43, %s59
      %p61 = scmp.eq.s32.totalorder %s21, 0
      %p62 = por %p60, %p61
      %s64 = sadd.s32 %s63, 1
      %p67 = scmp.eq.s32.totalorder %s15, 1
      %p68 = scmp.ne.s32.totalorder %s63, %s65
      %p69 = scmp.eq.s32.totalorder %s15, 0
      %p70 = por %p68, %p69
      %p71 = scmp.ne.s32.totalorder %s63, %s65
      %p72 = scmp.eq.s32.totalorder %s20, 1
      %p73 = por %p71, %p72
      %p74 = scmp.ne.s32.totalorder %s65, %s66
      %p75 = scmp.eq.s32.totalorder %s20, 0
      %p76 = por %p74, %p75
      %p77 = scmp.ne.s32.totalorder %s65, %s66
      %p78 = scmp.eq.s32.totalorder %s21, 1
      %p79 = por %p77, %p78
      %p81 = scmp.ne.s32.totalorder %s66, %s80
      %p82 = scmp.eq.s32.totalorder %s21, 0
      %p83 = por %p81, %p82
      %s85 = sadd.s32 %s84, 1
      %p88 = scmp.eq.s32.totalorder %s15, 1
      %p89 = scmp.ne.s32.totalorder %s84, %s86
      %p90 = scmp.eq.s32.totalorder %s15, 0
      %p91 = por %p89, %p90
      %p92 = scmp.ne.s32.totalorder %s84, %s86
      %p93 = scmp.eq.s32.totalorder %s20, 1
      %p94 = por %p92, %p93
      %p95 = scmp.ne.s32.totalorder %s86, %s87
      %p96 = scmp.eq.s32.totalorder %s20, 0
      %p97 = por %p95, %p96
      %p98 = scmp.ne.s32.totalorder %s86, %s87
      %p99 = scmp.eq.s32.totalorder %s21, 1
      %p100 = por %p98, %p99
      %p102 = scmp.ne.s32.totalorder %s87, %s101
      %p103 = scmp.eq.s32.totalorder %s21, 0
      %p104 = por %p102, %p103
      %s105 = ssub.s32 %s22, %s34
      %s106 = ssub.s32 %s23, %s30
      %s107 = sor.u32 %s105, %s106
      %p108 = scmp.eq.s32.totalorder %s107, 0
      %s110 = sadd.s32 %s109, 1
      %s111 = scalar_select %p108, %s109, %s110
      %p114 = pneg %p108
      %p115 = scmp.eq.s32.totalorder %s15, 1
      %p116 = por %p114, %p115
      %p117 = scmp.ne.s32.totalorder %s109, %s112
      %p118 = scmp.eq.s32.totalorder %s15, 0
      %p119 = por %p117, %p118
      %p120 = scmp.ne.s32.totalorder %s109, %s112
      %p121 = scmp.eq.s32.totalorder %s20, 1
      %p122 = por %p120, %p121
      %p123 = scmp.ne.s32.totalorder %s112, %s113
      %p124 = scmp.eq.s32.totalorder %s20, 0
      %p125 = por %p123, %p124
      %p126 = scmp.ne.s32.totalorder %s112, %s113
      %p127 = scmp.eq.s32.totalorder %s21, 1
      %p128 = por %p126, %p127
      %p130 = scmp.ne.s32.totalorder %s113, %s129
      %p131 = scmp.eq.s32.totalorder %s21, 0
      %p132 = por %p130, %p131
      %p133 = scmp.le.s32.totalorder 1, %s15
      %p134 = scmp.lt.s32.totalorder %s15, 3
      %p135 = pnand %p133, %p134
      %p136 = pneg %p135
      // Predicated region
      $region9: #{tpu_custom_call.1} parent=5 // pred_check
        _
      $region10: #{tpu_custom_call.1} parent=5 // pred_check_branch
        %138 = sbr.rel (%p135) target = $region12
      $region11: #{tpu_custom_call.1} parent=5 // pred_region
        %s139 = ssub.s32 %s15, 1
        // Predicated region
        $region13: #{tpu_custom_call.1} parent=11 // pred_check
          %p140 = pneg %p76
        $region14: #{tpu_custom_call.1} parent=11 // pred_check_branch
          %142 = sbr.rel (%p140) target = $region16
        $region15: #{tpu_custom_call.1} parent=11 // pred_region
          _
        $region16: #{tpu_custom_call.1} parent=11 // pred_fallthru
          _
        // Predicated region
        $region17: #{tpu_custom_call.1} parent=11 // pred_check
          %p143 = pneg %p97
        $region18: #{tpu_custom_call.1} parent=11 // pred_check_branch
          %145 = sbr.rel (%p143) target = $region20
        $region19: #{tpu_custom_call.1} parent=11 // pred_region
          _
        $region20: #{tpu_custom_call.1} parent=11 // pred_fallthru
          _
      $region12: #{tpu_custom_call.1} parent=5 // pred_fallthru
        _
      %p146 = scmp.lt.s32.totalorder %s15, 2
      // Predicated region
      $region21: #{tpu_custom_call.1} parent=5 // pred_check
        %p147 = pneg %p146
      $region22: #{tpu_custom_call.1} parent=5 // pred_check_branch
        %149 = sbr.rel (%p147) target = $region24
      $region23: #{tpu_custom_call.1} parent=5 // pred_region
        // Predicated region
        $region25: #{tpu_custom_call.1} parent=23 // pred_check
          %p150 = pneg %p49
        $region26: #{tpu_custom_call.1} parent=23 // pred_check_branch
          %152 = sbr.rel (%p150) target = $region28
        $region27: #{tpu_custom_call.1} parent=23 // pred_region
          %s153 = sand.u32 %s39, 1
          %s154 = scalar_lea.sflag [#allocation3], %s153
          %s155 = sand.u32 %s39, 1
          %s156 = smul.addr %s155, 16
          %s157 = scalar_lea.vmem [#allocation2], %s156
          %s158 = smul.u32 2, %s23
          %s160 = ssub.s32 256, 256
          %161 = vsyncadd %s154, %s160
          %s162 = smul.addr %s22, 2
          %s163 = sadd.s32 %s158, %s162
          %s164 = smul.addr %s163, 128
          %s165 = scalar_lea.hbm %s0, %s164
          %s167 = sshll.u32 %s157, 4
          %s168 = int_to_ptr.vmem [resolvable:$true] %s167
          %170 = dma.hbm_to_vmem [thread:$0]  %s165, 256, %s168, %s154
        $region28: #{tpu_custom_call.1} parent=23 // pred_fallthru
          _
      $region24: #{tpu_custom_call.1} parent=5 // pred_fallthru
        _
      %p171 = scmp.le.s32.totalorder 1, %s15
      %p172 = scmp.lt.s32.totalorder %s15, 3
      %p173 = pnand %p171, %p172
      %p174 = pneg %p173
      // Predicated region
      $region29: #{tpu_custom_call.1} parent=5 // pred_check
        _
      $region30: #{tpu_custom_call.1} parent=5 // pred_check_branch
        %176 = sbr.rel (%p173) target = $region32
      $region31: #{tpu_custom_call.1} parent=5 // pred_region
        %s177 = ssub.s32 %s15, 1
        %s178 = sand.u32 %s42, 1
        %s179 = scalar_lea.sflag [#allocation3], %s178
        %s180 = sand.u32 %s42, 1
        %s181 = smul.addr %s180, 16
        %s182 = scalar_lea.vmem [#allocation2], %s181
        // Predicated region
        $region33: #{tpu_custom_call.1} parent=31 // pred_check
          %p183 = pneg %p55
        $region34: #{tpu_custom_call.1} parent=31 // pred_check_branch
          %185 = sbr.rel (%p183) target = $region36
        $region35: #{tpu_custom_call.1} parent=31 // pred_region
          %186 = dma.done %s179, 256
        $region36: #{tpu_custom_call.1} parent=31 // pred_fallthru
          _
        %s187 = sand.u32 %s42, 1
        %s188 = scalar_lea.sflag [#allocation3], %s187
        %s189 = sand.u32 %s42, 1
        %s190 = smul.addr %s189, 16
        %s191 = scalar_lea.vmem [#allocation2], %s190
        %p192 = pneg %p55
        %p193 = pneg %p52
        %p194 = pneg %p76
        %p195 = pneg %p73
        %p196 = pneg %p97
        %p197 = pneg %p94
        %p198 = pneg %p125
        %p199 = pneg %p122
        %s200 = sand.u32 %s112, 1
        %s201 = scalar_lea.sflag [#allocation4], %s200
        %s202 = sand.u32 %s112, 1
        %s203 = smul.addr %s202, 8
        %s204 = scalar_lea.vmem [#allocation5], %s203
        %s205 = smul.u32 2, %s25
        %s206 = smul.u32 2, %s25
        %v207 = vld [vmem:[%s182] sm:$0xff]
        %v208 = vld [vmem:[%s182 + $0x8] sm:$0xff]
        %v209 = vld [vmem:[%s1] sm:$0xf]
        %v210 = vld [vmem:[%s2] sm:$0xf]
        %212 = vset.pattern.permute.xlu0 0
        %213 = vperm.xlu0 %212, %v210
        %v214 = vpop.permute.xlu0 %213
        %vm216 = vcmask 64512
        %v218 = vsel %vm216, %v209, 0
        %220 = vmatprep.subr.mxu0 0.0
        %221 = vmatpush1.msra.mxu0 0.0
        %222 = vmatprep.subr.mxu0 0.0
        %223 = vmatpush1.msra.mxu0 0.0
        %224 = vmatprep.subr.mxu0 0.0
        %225 = vmatpush1.msra.mxu0 0.0
        %226 = vmatprep.subr.mxu0 0.0
        %227 = vmatpush1.msra.mxu0 0.0
        %228 = vmatprep.subr.mxu0 0.0
        %229 = vmatpush1.msra.mxu0 0.0
        %230 = vmatprep.subr.mxu0 0.0
        %231 = vmatpush1.msra.mxu0 0.0
        %232 = vmatprep.subr.mxu0 0.0
        %233 = vmatpush1.msra.mxu0 0.0
        %234 = vmatprep.subr.mxu0 0.0
        %235 = vmatpush1.msra.mxu0 0.0
        %236 = vmatprep.subr.mxu0 0.0
        %237 = vmatpush1.msra.mxu0 0.0
        %238 = vmatprep.subr.mxu0 0.0
        %239 = vmatpush1.msra.mxu0 0.0
        %240 = vmatprep.subr.mxu0 0.0
        %241 = vmatpush1.msra.mxu0 0.0
        %242 = vmatprep.subr.mxu0 0.0
        %243 = vmatpush1.msra.mxu0 0.0
        %244 = vmatprep.subr.mxu0 0.0
        %245 = vmatpush1.msra.mxu0 0.0
        %246 = vmatprep.subr.mxu0 0.0
        %247 = vmatpush1.msra.mxu0 0.0
        %248 = vmatprep.subr.mxu0 0.0
        %249 = vmatpush1.msra.mxu0 0.0
        %v250 = vand.u32 %v208, 4294901760
        %251 = vmatprep.subr.mxu0 %v250
        %v252 = vand.u32 %v207, 4294901760
        %253 = vmatpush1.msra.mxu0 %v252
        %254 = vmatprep.subr.mxu0 0.0
        %255 = vmatpush2.msra.mxu0 0.0
        %256 = vmatprep.subr.mxu0 0.0
        %257 = vmatpush2.msra.mxu0 0.0
        %258 = vmatprep.subr.mxu0 0.0
        %259 = vmatpush2.msra.mxu0 0.0
        %260 = vmatprep.subr.mxu0 0.0
        %261 = vmatpush2.msra.mxu0 0.0
        %262 = vmatprep.subr.mxu0 0.0
        %263 = vmatpush2.msra.mxu0 0.0
        %264 = vmatprep.subr.mxu0 0.0
        %265 = vmatpush2.msra.mxu0 0.0
        %266 = vmatprep.subr.mxu0 0.0
        %267 = vmatpush2.msra.mxu0 0.0
        %268 = vmatprep.subr.mxu0 0.0
        %269 = vmatpush2.msra.mxu0 0.0
        %270 = vmatprep.subr.mxu0 0.0
        %271 = vmatpush2.msra.mxu0 0.0
        %272 = vmatprep.subr.mxu0 0.0
        %273 = vmatpush2.msra.mxu0 0.0
        %274 = vmatprep.subr.mxu0 0.0
        %275 = vmatpush2.msra.mxu0 0.0
        %276 = vmatprep.subr.mxu0 0.0
        %277 = vmatpush2.msra.mxu0 0.0
        %278 = vmatprep.subr.mxu0 0.0
        %279 = vmatpush2.msra.mxu0 0.0
        %280 = vmatprep.subr.mxu0 0.0
        %281 = vmatpush2.msra.mxu0 0.0
        %282 = vmatprep.subr.mxu0 0.0
        %283 = vmatpush2.msra.mxu0 0.0
        %284 = vmatprep.subr.mxu0 0.0
        %285 = vmatpush2.msra.mxu0 0.0
        %286 = vmatprep.mubr.f32.mxu0 0.0
        %v287 = vand.u32 %v218, 4294901760
        %v288 = vsub.f32 %v218, %v287
        %v289 = vand.u32 %v288, 4294901760
        %v290 = vsub.f32 %v288, %v289
        %v291 = vand.u32 %v290, 4294901760
        %292 = vmatmul.mubr.f32.gmra.mxu0 %v291
        %v293 = vpop.f32.mrf.mxu0
        %v294 = vadd.f32 %v214, %v293
        %v295 = vpop.f32.mrf.mxu0
        %v296 = vadd.f32 %v214, %v295
        %297 = vdwg.mxu0
        %298 = vmatprep.subr.mxu0 0.0
        %299 = vmatpush1.msra.mxu0 0.0
        %300 = vmatprep.subr.mxu0 0.0
        %301 = vmatpush1.msra.mxu0 0.0
        %302 = vmatprep.subr.mxu0 0.0
        %303 = vmatpush1.msra.mxu0 0.0
        %304 = vmatprep.subr.mxu0 0.0
        %305 = vmatpush1.msra.mxu0 0.0
        %306 = vmatprep.subr.mxu0 0.0
        %307 = vmatpush1.msra.mxu0 0.0
        %308 = vmatprep.subr.mxu0 0.0
        %309 = vmatpush1.msra.mxu0 0.0
        %310 = vmatprep.subr.mxu0 0.0
        %311 = vmatpush1.msra.mxu0 0.0
        %312 = vmatprep.subr.mxu0 0.0
        %313 = vmatpush1.msra.mxu0 0.0
        %314 = vmatprep.subr.mxu0 0.0
        %315 = vmatpush1.msra.mxu0 0.0
        %316 = vmatprep.subr.mxu0 0.0
        %317 = vmatpush1.msra.mxu0 0.0
        %318 = vmatprep.subr.mxu0 0.0
        %319 = vmatpush1.msra.mxu0 0.0
        %320 = vmatprep.subr.mxu0 0.0
        %321 = vmatpush1.msra.mxu0 0.0
        %322 = vmatprep.subr.mxu0 0.0
        %323 = vmatpush1.msra.mxu0 0.0
        %324 = vmatprep.subr.mxu0 0.0
        %325 = vmatpush1.msra.mxu0 0.0
        %326 = vmatprep.subr.mxu0 0.0
        %327 = vmatpush1.msra.mxu0 0.0
        %v328 = vand.u32 %v208, 4294901760
        %v329 = vsub.f32 %v208, %v328
        %v330 = vand.u32 %v329, 4294901760
        %v331 = vsub.f32 %v329, %v330
        %v332 = vand.u32 %v331, 4294901760
        %333 = vmatprep.subr.mxu0 %v332
        %v334 = vand.u32 %v207, 4294901760
        %v335 = vsub.f32 %v207, %v334
        %v336 = vand.u32 %v335, 4294901760
        %v337 = vsub.f32 %v335, %v336
        %v338 = vand.u32 %v337, 4294901760
        %339 = vmatpush1.msra.mxu0 %v338
        %340 = vmatprep.subr.mxu0 0.0
        %341 = vmatpush2.msra.mxu0 0.0
        %342 = vmatprep.subr.mxu0 0.0
        %343 = vmatpush2.msra.mxu0 0.0
        %344 = vmatprep.subr.mxu0 0.0
        %345 = vmatpush2.msra.mxu0 0.0
        %346 = vmatprep.subr.mxu0 0.0
        %347 = vmatpush2.msra.mxu0 0.0
        %348 = vmatprep.subr.mxu0 0.0
        %349 = vmatpush2.msra.mxu0 0.0
        %350 = vmatprep.subr.mxu0 0.0
        %351 = vmatpush2.msra.mxu0 0.0
        %352 = vmatprep.subr.mxu0 0.0
        %353 = vmatpush2.msra.mxu0 0.0
        %354 = vmatprep.subr.mxu0 0.0
        %355 = vmatpush2.msra.mxu0 0.0
        %356 = vmatprep.subr.mxu0 0.0
        %357 = vmatpush2.msra.mxu0 0.0
        %358 = vmatprep.subr.mxu0 0.0
        %359 = vmatpush2.msra.mxu0 0.0
        %360 = vmatprep.subr.mxu0 0.0
        %361 = vmatpush2.msra.mxu0 0.0
        %362 = vmatprep.subr.mxu0 0.0
        %363 = vmatpush2.msra.mxu0 0.0
        %364 = vmatprep.subr.mxu0 0.0
        %365 = vmatpush2.msra.mxu0 0.0
        %366 = vmatprep.subr.mxu0 0.0
        %367 = vmatpush2.msra.mxu0 0.0
        %368 = vmatprep.subr.mxu0 0.0
        %369 = vmatpush2.msra.mxu0 0.0
        %370 = vmatprep.subr.mxu0 0.0
        %371 = vmatpush2.msra.mxu0 0.0
        %372 = vmatprep.mubr.f32.mxu0 0.0
        %v373 = vand.u32 %v218, 4294901760
        %374 = vmatmul.mubr.f32.gmra.mxu0 %v373
        %v375 = vpop.f32.mrf.mxu0
        %v376 = vadd.f32 %v294, %v375
        %v377 = vpop.f32.mrf.mxu0
        %v378 = vadd.f32 %v296, %v377
        %379 = vdwg.mxu0
        %380 = vmatprep.subr.mxu0 0.0
        %381 = vmatpush1.msra.mxu0 0.0
        %382 = vmatprep.subr.mxu0 0.0
        %383 = vmatpush1.msra.mxu0 0.0
        %384 = vmatprep.subr.mxu0 0.0
        %385 = vmatpush1.msra.mxu0 0.0
        %386 = vmatprep.subr.mxu0 0.0
        %387 = vmatpush1.msra.mxu0 0.0
        %388 = vmatprep.subr.mxu0 0.0
        %389 = vmatpush1.msra.mxu0 0.0
        %390 = vmatprep.subr.mxu0 0.0
        %391 = vmatpush1.msra.mxu0 0.0
        %392 = vmatprep.subr.mxu0 0.0
        %393 = vmatpush1.msra.mxu0 0.0
        %394 = vmatprep.subr.mxu0 0.0
        %395 = vmatpush1.msra.mxu0 0.0
        %396 = vmatprep.subr.mxu0 0.0
        %397 = vmatpush1.msra.mxu0 0.0
        %398 = vmatprep.subr.mxu0 0.0
        %399 = vmatpush1.msra.mxu0 0.0
        %400 = vmatprep.subr.mxu0 0.0
        %401 = vmatpush1.msra.mxu0 0.0
        %402 = vmatprep.subr.mxu0 0.0
        %403 = vmatpush1.msra.mxu0 0.0
        %404 = vmatprep.subr.mxu0 0.0
        %405 = vmatpush1.msra.mxu0 0.0
        %406 = vmatprep.subr.mxu0 0.0
        %407 = vmatpush1.msra.mxu0 0.0
        %408 = vmatprep.subr.mxu0 0.0
        %409 = vmatpush1.msra.mxu0 0.0
        %v410 = vand.u32 %v208, 4294901760
        %v411 = vsub.f32 %v208, %v410
        %412 = vmatprep.subr.mxu0 %v411
        %v413 = vand.u32 %v207, 4294901760
        %v414 = vsub.f32 %v207, %v413
        %415 = vmatpush1.msra.mxu0 %v414
        %416 = vmatprep.subr.mxu0 0.0
        %417 = vmatpush2.msra.mxu0 0.0
        %418 = vmatprep.subr.mxu0 0.0
        %419 = vmatpush2.msra.mxu0 0.0
        %420 = vmatprep.subr.mxu0 0.0
        %421 = vmatpush2.msra.mxu0 0.0
        %422 = vmatprep.subr.mxu0 0.0
        %423 = vmatpush2.msra.mxu0 0.0
        %424 = vmatprep.subr.mxu0 0.0
        %425 = vmatpush2.msra.mxu0 0.0
        %426 = vmatprep.subr.mxu0 0.0
        %427 = vmatpush2.msra.mxu0 0.0
        %428 = vmatprep.subr.mxu0 0.0
        %429 = vmatpush2.msra.mxu0 0.0
        %430 = vmatprep.subr.mxu0 0.0
        %431 = vmatpush2.msra.mxu0 0.0
        %432 = vmatprep.subr.mxu0 0.0
        %433 = vmatpush2.msra.mxu0 0.0
        %434 = vmatprep.subr.mxu0 0.0
        %435 = vmatpush2.msra.mxu0 0.0
        %436 = vmatprep.subr.mxu0 0.0
        %437 = vmatpush2.msra.mxu0 0.0
        %438 = vmatprep.subr.mxu0 0.0
        %439 = vmatpush2.msra.mxu0 0.0
        %440 = vmatprep.subr.mxu0 0.0
        %441 = vmatpush2.msra.mxu0 0.0
        %442 = vmatprep.subr.mxu0 0.0
        %443 = vmatpush2.msra.mxu0 0.0
        %444 = vmatprep.subr.mxu0 0.0
        %445 = vmatpush2.msra.mxu0 0.0
        %446 = vmatprep.subr.mxu0 0.0
        %447 = vmatpush2.msra.mxu0 0.0
        %448 = vmatprep.mubr.f32.mxu0 0.0
        %v449 = vand.u32 %v218, 4294901760
        %v450 = vsub.f32 %v218, %v449
        %451 = vmatmul.mubr.f32.gmra.mxu0 %v450
        %v452 = vpop.f32.mrf.mxu0
        %v453 = vadd.f32 %v376, %v452
        %v454 = vpop.f32.mrf.mxu0
        %v455 = vadd.f32 %v378, %v454
        %456 = vdwg.mxu0
        %457 = vmatprep.subr.mxu0 0.0
        %458 = vmatpush1.msra.mxu0 0.0
        %459 = vmatprep.subr.mxu0 0.0
        %460 = vmatpush1.msra.mxu0 0.0
        %461 = vmatprep.subr.mxu0 0.0
        %462 = vmatpush1.msra.mxu0 0.0
        %463 = vmatprep.subr.mxu0 0.0
        %464 = vmatpush1.msra.mxu0 0.0
        %465 = vmatprep.subr.mxu0 0.0
        %466 = vmatpush1.msra.mxu0 0.0
        %467 = vmatprep.subr.mxu0 0.0
        %468 = vmatpush1.msra.mxu0 0.0
        %469 = vmatprep.subr.mxu0 0.0
        %470 = vmatpush1.msra.mxu0 0.0
        %471 = vmatprep.subr.mxu0 0.0
        %472 = vmatpush1.msra.mxu0 0.0
        %473 = vmatprep.subr.mxu0 0.0
        %474 = vmatpush1.msra.mxu0 0.0
        %475 = vmatprep.subr.mxu0 0.0
        %476 = vmatpush1.msra.mxu0 0.0
        %477 = vmatprep.subr.mxu0 0.0
        %478 = vmatpush1.msra.mxu0 0.0
        %479 = vmatprep.subr.mxu0 0.0
        %480 = vmatpush1.msra.mxu0 0.0
        %481 = vmatprep.subr.mxu0 0.0
        %482 = vmatpush1.msra.mxu0 0.0
        %483 = vmatprep.subr.mxu0 0.0
        %484 = vmatpush1.msra.mxu0 0.0
        %485 = vmatprep.subr.mxu0 0.0
        %486 = vmatpush1.msra.mxu0 0.0
        %v487 = vand.u32 %v208, 4294901760
        %488 = vmatprep.subr.mxu0 %v487
        %v489 = vand.u32 %v207, 4294901760
        %490 = vmatpush1.msra.mxu0 %v489
        %491 = vmatprep.subr.mxu0 0.0
        %492 = vmatpush2.msra.mxu0 0.0
        %493 = vmatprep.subr.mxu0 0.0
        %494 = vmatpush2.msra.mxu0 0.0
        %495 = vmatprep.subr.mxu0 0.0
        %496 = vmatpush2.msra.mxu0 0.0
        %497 = vmatprep.subr.mxu0 0.0
        %498 = vmatpush2.msra.mxu0 0.0
        %499 = vmatprep.subr.mxu0 0.0
        %500 = vmatpush2.msra.mxu0 0.0
        %501 = vmatprep.subr.mxu0 0.0
        %502 = vmatpush2.msra.mxu0 0.0
        %503 = vmatprep.subr.mxu0 0.0
        %504 = vmatpush2.msra.mxu0 0.0
        %505 = vmatprep.subr.mxu0 0.0
        %506 = vmatpush2.msra.mxu0 0.0
        %507 = vmatprep.subr.mxu0 0.0
        %508 = vmatpush2.msra.mxu0 0.0
        %509 = vmatprep.subr.mxu0 0.0
        %510 = vmatpush2.msra.mxu0 0.0
        %511 = vmatprep.subr.mxu0 0.0
        %512 = vmatpush2.msra.mxu0 0.0
        %513 = vmatprep.subr.mxu0 0.0
        %514 = vmatpush2.msra.mxu0 0.0
        %515 = vmatprep.subr.mxu0 0.0
        %516 = vmatpush2.msra.mxu0 0.0
        %517 = vmatprep.subr.mxu0 0.0
        %518 = vmatpush2.msra.mxu0 0.0
        %519 = vmatprep.subr.mxu0 0.0
        %520 = vmatpush2.msra.mxu0 0.0
        %521 = vmatprep.subr.mxu0 0.0
        %522 = vmatpush2.msra.mxu0 0.0
        %523 = vmatprep.mubr.f32.mxu0 0.0
        %v524 = vand.u32 %v218, 4294901760
        %v525 = vsub.f32 %v218, %v524
        %v526 = vand.u32 %v525, 4294901760
        %527 = vmatmul.mubr.f32.gmra.mxu0 %v526
        %v528 = vpop.f32.mrf.mxu0
        %v529 = vadd.f32 %v453, %v528
        %v530 = vpop.f32.mrf.mxu0
        %v531 = vadd.f32 %v455, %v530
        %532 = vdwg.mxu0
        %533 = vmatprep.subr.mxu0 0.0
        %534 = vmatpush1.msra.mxu0 0.0
        %535 = vmatprep.subr.mxu0 0.0
        %536 = vmatpush1.msra.mxu0 0.0
        %537 = vmatprep.subr.mxu0 0.0
        %538 = vmatpush1.msra.mxu0 0.0
        %539 = vmatprep.subr.mxu0 0.0
        %540 = vmatpush1.msra.mxu0 0.0
        %541 = vmatprep.subr.mxu0 0.0
        %542 = vmatpush1.msra.mxu0 0.0
        %543 = vmatprep.subr.mxu0 0.0
        %544 = vmatpush1.msra.mxu0 0.0
        %545 = vmatprep.subr.mxu0 0.0
        %546 = vmatpush1.msra.mxu0 0.0
        %547 = vmatprep.subr.mxu0 0.0
        %548 = vmatpush1.msra.mxu0 0.0
        %549 = vmatprep.subr.mxu0 0.0
        %550 = vmatpush1.msra.mxu0 0.0
        %551 = vmatprep.subr.mxu0 0.0
        %552 = vmatpush1.msra.mxu0 0.0
        %553 = vmatprep.subr.mxu0 0.0
        %554 = vmatpush1.msra.mxu0 0.0
        %555 = vmatprep.subr.mxu0 0.0
        %556 = vmatpush1.msra.mxu0 0.0
        %557 = vmatprep.subr.mxu0 0.0
        %558 = vmatpush1.msra.mxu0 0.0
        %559 = vmatprep.subr.mxu0 0.0
        %560 = vmatpush1.msra.mxu0 0.0
        %561 = vmatprep.subr.mxu0 0.0
        %562 = vmatpush1.msra.mxu0 0.0
        %v563 = vand.u32 %v208, 4294901760
        %v564 = vsub.f32 %v208, %v563
        %v565 = vand.u32 %v564, 4294901760
        %566 = vmatprep.subr.mxu0 %v565
        %v567 = vand.u32 %v207, 4294901760
        %v568 = vsub.f32 %v207, %v567
        %v569 = vand.u32 %v568, 4294901760
        %570 = vmatpush1.msra.mxu0 %v569
        %571 = vmatprep.subr.mxu0 0.0
        %572 = vmatpush2.msra.mxu0 0.0
        %573 = vmatprep.subr.mxu0 0.0
        %574 = vmatpush2.msra.mxu0 0.0
        %575 = vmatprep.subr.mxu0 0.0
        %576 = vmatpush2.msra.mxu0 0.0
        %577 = vmatprep.subr.mxu0 0.0
        %578 = vmatpush2.msra.mxu0 0.0
        %579 = vmatprep.subr.mxu0 0.0
        %580 = vmatpush2.msra.mxu0 0.0
        %581 = vmatprep.subr.mxu0 0.0
        %582 = vmatpush2.msra.mxu0 0.0
        %583 = vmatprep.subr.mxu0 0.0
        %584 = vmatpush2.msra.mxu0 0.0
        %585 = vmatprep.subr.mxu0 0.0
        %586 = vmatpush2.msra.mxu0 0.0
        %587 = vmatprep.subr.mxu0 0.0
        %588 = vmatpush2.msra.mxu0 0.0
        %589 = vmatprep.subr.mxu0 0.0
        %590 = vmatpush2.msra.mxu0 0.0
        %591 = vmatprep.subr.mxu0 0.0
        %592 = vmatpush2.msra.mxu0 0.0
        %593 = vmatprep.subr.mxu0 0.0
        %594 = vmatpush2.msra.mxu0 0.0
        %595 = vmatprep.subr.mxu0 0.0
        %596 = vmatpush2.msra.mxu0 0.0
        %597 = vmatprep.subr.mxu0 0.0
        %598 = vmatpush2.msra.mxu0 0.0
        %599 = vmatprep.subr.mxu0 0.0
        %600 = vmatpush2.msra.mxu0 0.0
        %601 = vmatprep.subr.mxu0 0.0
        %602 = vmatpush2.msra.mxu0 0.0
        %603 = vmatprep.mubr.f32.mxu0 0.0
        %v604 = vand.u32 %v218, 4294901760
        %605 = vmatmul.mubr.f32.gmra.mxu0 %v604
        %v606 = vpop.f32.mrf.mxu0
        %v607 = vadd.f32 %v529, %v606
        %v608 = vpop.f32.mrf.mxu0
        %v609 = vadd.f32 %v531, %v608
        %610 = vdwg.mxu0
        %611 = vmatprep.subr.mxu0 0.0
        %612 = vmatpush1.msra.mxu0 0.0
        %613 = vmatprep.subr.mxu0 0.0
        %614 = vmatpush1.msra.mxu0 0.0
        %615 = vmatprep.subr.mxu0 0.0
        %616 = vmatpush1.msra.mxu0 0.0
        %617 = vmatprep.subr.mxu0 0.0
        %618 = vmatpush1.msra.mxu0 0.0
        %619 = vmatprep.subr.mxu0 0.0
        %620 = vmatpush1.msra.mxu0 0.0
        %621 = vmatprep.subr.mxu0 0.0
        %622 = vmatpush1.msra.mxu0 0.0
        %623 = vmatprep.subr.mxu0 0.0
        %624 = vmatpush1.msra.mxu0 0.0
        %625 = vmatprep.subr.mxu0 0.0
        %626 = vmatpush1.msra.mxu0 0.0
        %627 = vmatprep.subr.mxu0 0.0
        %628 = vmatpush1.msra.mxu0 0.0
        %629 = vmatprep.subr.mxu0 0.0
        %630 = vmatpush1.msra.mxu0 0.0
        %631 = vmatprep.subr.mxu0 0.0
        %632 = vmatpush1.msra.mxu0 0.0
        %633 = vmatprep.subr.mxu0 0.0
        %634 = vmatpush1.msra.mxu0 0.0
        %635 = vmatprep.subr.mxu0 0.0
        %636 = vmatpush1.msra.mxu0 0.0
        %637 = vmatprep.subr.mxu0 0.0
        %638 = vmatpush1.msra.mxu0 0.0
        %639 = vmatprep.subr.mxu0 0.0
        %640 = vmatpush1.msra.mxu0 0.0
        %v641 = vand.u32 %v208, 4294901760
        %642 = vmatprep.subr.mxu0 %v641
        %v643 = vand.u32 %v207, 4294901760
        %644 = vmatpush1.msra.mxu0 %v643
        %645 = vmatprep.subr.mxu0 0.0
        %646 = vmatpush2.msra.mxu0 0.0
        %647 = vmatprep.subr.mxu0 0.0
        %648 = vmatpush2.msra.mxu0 0.0
        %649 = vmatprep.subr.mxu0 0.0
        %650 = vmatpush2.msra.mxu0 0.0
        %651 = vmatprep.subr.mxu0 0.0
        %652 = vmatpush2.msra.mxu0 0.0
        %653 = vmatprep.subr.mxu0 0.0
        %654 = vmatpush2.msra.mxu0 0.0
        %655 = vmatprep.subr.mxu0 0.0
        %656 = vmatpush2.msra.mxu0 0.0
        %657 = vmatprep.subr.mxu0 0.0
        %658 = vmatpush2.msra.mxu0 0.0
        %659 = vmatprep.subr.mxu0 0.0
        %660 = vmatpush2.msra.mxu0 0.0
        %661 = vmatprep.subr.mxu0 0.0
        %662 = vmatpush2.msra.mxu0 0.0
        %663 = vmatprep.subr.mxu0 0.0
        %664 = vmatpush2.msra.mxu0 0.0
        %665 = vmatprep.subr.mxu0 0.0
        %666 = vmatpush2.msra.mxu0 0.0
        %667 = vmatprep.subr.mxu0 0.0
        %668 = vmatpush2.msra.mxu0 0.0
        %669 = vmatprep.subr.mxu0 0.0
        %670 = vmatpush2.msra.mxu0 0.0
        %671 = vmatprep.subr.mxu0 0.0
        %672 = vmatpush2.msra.mxu0 0.0
        %673 = vmatprep.subr.mxu0 0.0
        %674 = vmatpush2.msra.mxu0 0.0
        %675 = vmatprep.subr.mxu0 0.0
        %676 = vmatpush2.msra.mxu0 0.0
        %677 = vmatprep.mubr.f32.mxu0 0.0
        %v678 = vand.u32 %v218, 4294901760
        %679 = vmatmul.mubr.f32.gmra.mxu0 %v678
        %v680 = vpop.f32.mrf.mxu0
        %v681 = vadd.f32 %v607, %v680
        %v682 = vpop.f32.mrf.mxu0
        %v683 = vadd.f32 %v609, %v682
        %684 = vdwg.mxu0
        %v687 = vcombine.low %v681, %v683
        %689 = vst [vmem:[%s204] sm:$0xff] %v687
        %s690 = sand.u32 %s112, 1
        %s691 = scalar_lea.sflag [#allocation4], %s690
        %s692 = sand.u32 %s112, 1
        %s693 = smul.addr %s692, 8
        %s694 = scalar_lea.vmem [#allocation5], %s693
        // Predicated region
        $region37: #{tpu_custom_call.1} parent=31 // pred_check
          %p695 = pneg %p122
        $region38: #{tpu_custom_call.1} parent=31 // pred_check_branch
          %697 = sbr.rel (%p695) target = $region40
        $region39: #{tpu_custom_call.1} parent=31 // pred_region
          %s698 = smul.u32 2, %s25
          %s700 = ssub.s32 128, 128
          %701 = vsyncadd %s691, %s700
          %s702 = smul.addr %s24, 2
          %s703 = sadd.s32 %s698, %s702
          %s704 = smul.addr %s703, 64
          %s705 = scalar_lea.hbm %s3, %s704
          %s707 = sshll.u32 %s694, 4
          %s708 = int_to_ptr.vmem [resolvable:$true] %s707
          %710 = dma.vmem_to_hbm [thread:$0]  %s708, 128, %s705, %s691
        $region40: #{tpu_custom_call.1} parent=31 // pred_fallthru
          _
      $region32: #{tpu_custom_call.1} parent=5 // pred_fallthru
        _
      %p711 = scmp.le.s32.totalorder 2, %s15
      // Predicated region
      $region41: #{tpu_custom_call.1} parent=5 // pred_check
        %p712 = pneg %p711
      $region42: #{tpu_custom_call.1} parent=5 // pred_check_branch
        %714 = sbr.rel (%p712) target = $region44
      $region43: #{tpu_custom_call.1} parent=5 // pred_region
        %s715 = ssub.s32 %s15, 2
        // Predicated region
        $region45: #{tpu_custom_call.1} parent=43 // pred_check
          %p716 = pneg %p128
        $region46: #{tpu_custom_call.1} parent=43 // pred_check_branch
          %718 = sbr.rel (%p716) target = $region48
        $region47: #{tpu_custom_call.1} parent=43 // pred_region
          %s719 = sand.u32 %s113, 1
          %s720 = scalar_lea.sflag [#allocation4], %s719
          %s721 = sand.u32 %s113, 1
          %s722 = smul.addr %s721, 8
          %s723 = scalar_lea.vmem [#allocation5], %s722
          %724 = dma.done %s720, 128
        $region48: #{tpu_custom_call.1} parent=43 // pred_fallthru
          _
      $region44: #{tpu_custom_call.1} parent=5 // pred_fallthru
        _
    $region6: #{tpu_custom_call.1} parent=1 // loop_footer
      %s19 = sadd.s32 1, %s15
    $region7: #{tpu_custom_call.1} parent=1 // loop_footer_branch
      %14 = sbr.rel target = $region3
    $region8: #{tpu_custom_call.1} parent=1 // loop_exit
      _
    %725 = vsyncpa [#allocation3], 1
    %s726 = scalar_lea.sflag [#allocation3], 1
    %727 = vsyncpa %s726, 1
    %728 = vsyncpa [#allocation4], 1
    %s729 = scalar_lea.sflag [#allocation4], 1
    %730 = vsyncpa %s729, 1

</llo_original>
